<compile_context>
chip_gen: v7x
topology: tpu7x:2x2x1
jax: 0.10.0
libtpu: 0.0.40
codegen_flags: <defaults>
</compile_context>

<pallas_src>
import jax
import jax.numpy as jnp
from jax.experimental import pallas as pl
from jax.experimental.pallas import tpu as pltpu

_BIG = 1.0e12


def _mlcce_kernel(preds_ref, target_ref, loss_ref):
    p = preds_ref[...].astype(jnp.float32)        # (tile_rows, C)
    t = target_ref[...]                           # (tile_rows, C) bf16, 0/1
    pos = t > 0

    # (1 - 2*t) * p  ==  where(t>0, -p, p); then mask the wrong class set out.
    p_signed = jnp.where(pos, -p, p)
    p_neg = jnp.where(pos, jnp.float32(-_BIG), p_signed)
    p_pos = jnp.where(pos, p_signed, jnp.float32(-_BIG))

    def lse_with_zero(x):
        # logsumexp over last dim with an implicit extra 0 entry:
        # logsumexp([x..., 0]) = m + log(sum(exp(x - m)) + exp(-m)),  m >= 0
        m = jnp.maximum(jnp.max(x, axis=-1, keepdims=True), 0.0)
        s = jnp.sum(jnp.exp(x - m), axis=-1, keepdims=True) + jnp.exp(-m)
        return m + jnp.log(s)                     # (tile_rows, 1)

    loss_ref[...] = lse_with_zero(p_neg) + lse_with_zero(p_pos)


def _round_up(x, m):
    return (x + m - 1) // m * m


def multilabel_categorical_crossentropy(preds, target, *, tile_rows=None):
    """preds, target: same shape (..., C). Returns scalar f32 mean loss."""
    assert preds.shape == target.shape
    C = preds.shape[-1]
    preds2 = preds.reshape(-1, C).astype(jnp.float32)
    # target is strictly 0/1 -> exact in bf16; halves its HBM footprint.
    target2 = target.reshape(-1, C).astype(jnp.bfloat16)
    R = preds2.shape[0]

    if tile_rows is None:
        # Size the row tile so (2 inputs x 2 pipeline buffers) stays well under
        # the scoped VMEM limit on every generation (conservative for v7x 64 MiB).
        buffer_budget = 16 * 1024 * 1024          # bytes for pipelined input bufs
        per_row_bytes = C * (4 + 2) * 2           # f32 preds + bf16 target, 2 bufs
        tile_rows = max(8, min(2048, buffer_budget // per_row_bytes))
        tile_rows = (tile_rows // 8) * 8
        tile_rows = min(tile_rows, _round_up(R, 8))

    # Ragged last tile: pad rows with zeros; padded rows are dropped before the
    # mean, so they contribute nothing.
    R_pad = _round_up(R, tile_rows)
    if R_pad != R:
        pad = R_pad - R
        preds2 = jnp.pad(preds2, ((0, pad), (0, 0)))
        target2 = jnp.pad(target2, ((0, pad), (0, 0)))

    grid = (R_pad // tile_rows,)
    cost = pl.CostEstimate(
        flops=10 * R_pad * C,
        transcendentals=2 * R_pad * C,
        bytes_accessed=(4 + 2) * R_pad * C + 4 * R_pad,
    )

    per_row_loss = pl.pallas_call(
        _mlcce_kernel,
        out_shape=jax.ShapeDtypeStruct((R_pad, 1), jnp.float32),
        grid_spec=pltpu.PrefetchScalarGridSpec(
            num_scalar_prefetch=0,
            grid=grid,
            in_specs=[
                pl.BlockSpec((tile_rows, C), lambda i: (i, 0)),
                pl.BlockSpec((tile_rows, C), lambda i: (i, 0)),
            ],
            out_specs=pl.BlockSpec((tile_rows, 1), lambda i: (i, 0)),
        ),
        compiler_params=pltpu.CompilerParams(
            dimension_semantics=("parallel",),
            vmem_limit_bytes=32 * 1024 * 1024,
        ),
        cost_estimate=cost,
    )(preds2, target2)

    # Mean over valid rows only; pairwise XLA reduction (no serial f32 accumulator).
    return jnp.mean(per_row_loss[:R, 0])


def _reference(preds, target):
    preds = (1.0 - 2.0 * target) * preds
    preds_neg = preds - target * _BIG
    preds_pos = preds - (1.0 - target) * _BIG
    zeros = jnp.zeros_like(preds[..., :1])
    preds_neg = jnp.concatenate([preds_neg, zeros], axis=-1)
    preds_pos = jnp.concatenate([preds_pos, zeros], axis=-1)
    neg_loss = jax.scipy.special.logsumexp(preds_neg, axis=-1)
    pos_loss = jax.scipy.special.logsumexp(preds_pos, axis=-1)
    return (neg_loss + pos_loss).mean()


if __name__ == "__main__":
    key = jax.random.PRNGKey(0)

    # Case 1: (batch=4, seq=8, num_labels=128) -> 32 rows x 128 classes.
    kp, kt, key = jax.random.split(key, 3)
    shape = (4, 8, 128)
    preds = jax.random.normal(kp, shape, dtype=jnp.float32) * 2.0
    target = (jax.random.uniform(kt, shape) < 0.3).astype(jnp.float32)

    loss = jax.block_until_ready(multilabel_categorical_crossentropy(preds, target))
    ref = _reference(preds, target)
    assert jnp.allclose(loss, ref, rtol=1e-5, atol=1e-5), (loss, ref)

    # Case 2: ragged row count (exercises the padding path), wider class dim.
    kp2, kt2 = jax.random.split(key)
    shape2 = (5, 7, 256)
    preds2 = jax.random.normal(kp2, shape2, dtype=jnp.float32) * 2.0
    target2 = (jax.random.uniform(kt2, shape2) < 0.3).astype(jnp.float32)

    loss2 = jax.block_until_ready(multilabel_categorical_crossentropy(preds2, target2))
    ref2 = _reference(preds2, target2)
    assert jnp.allclose(loss2, ref2, rtol=1e-5, atol=1e-5), (loss2, ref2)

    print("KERNEL_OK")
</pallas_src>

<mosaic_0001>
module attributes {stable_mosaic.version = 11 : i64} {
  func.func @_mlcce_kernel(%arg0: i32, %arg1: memref<32x128xf32, #tpu.memory_space<vmem>>, %arg2: memref<32x128xbf16, #tpu.memory_space<vmem>>, %arg3: memref<32x1xf32, #tpu.memory_space<vmem>>) attributes {dimension_semantics = [#tpu.dimension_semantics<parallel>], iteration_bounds = array<i64: 1>, scalar_prefetch = 0 : i64, scratch_operands = 0 : i64, tpu.core_type = #tpu.core_type<tc>, window_params = [{transform_indices = @transform_0, window_bounds = array<i64: 32, 128>}, {transform_indices = @transform_1, window_bounds = array<i64: 32, 128>}, {transform_indices = @transform_2, window_bounds = array<i64: 32, 1>}]} {
    %c0 = arith.constant 0 : index
    %c0_0 = arith.constant 0 : index
    %0 = vector.load %arg1[%c0, %c0_0] : memref<32x128xf32, #tpu.memory_space<vmem>>, vector<32x128xf32>
    %c0_1 = arith.constant 0 : index
    %c0_2 = arith.constant 0 : index
    %1 = vector.load %arg2[%c0_1, %c0_2] : memref<32x128xbf16, #tpu.memory_space<vmem>>, vector<32x128xbf16>
    %cst = arith.constant 0.000000e+00 : bf16
    %2 = vector.broadcast %cst : bf16 to vector<32x128xbf16>
    %3 = arith.cmpf ogt, %1, %2 : vector<32x128xbf16>
    %cst_3 = arith.constant 0.000000e+00 : f32
    %4 = vector.broadcast %cst_3 : f32 to vector<32x128xf32>
    %5 = arith.subf %4, %0 : vector<32x128xf32>
    %6 = arith.select %3, %5, %0 : vector<32x128xi1>, vector<32x128xf32>
    %cst_4 = arith.constant -9.99999995E+11 : f32
    %7 = vector.broadcast %cst_4 : f32 to vector<32x128xf32>
    %8 = arith.select %3, %7, %6 : vector<32x128xi1>, vector<32x128xf32>
    %cst_5 = arith.constant -9.99999995E+11 : f32
    %9 = vector.broadcast %cst_5 : f32 to vector<32x128xf32>
    %10 = arith.select %3, %6, %9 : vector<32x128xi1>, vector<32x128xf32>
    %cst_6 = arith.constant dense<0xFF800000> : vector<32xf32>
    %11 = vector.multi_reduction <maximumf>, %8, %cst_6 [1] : vector<32x128xf32> to vector<32xf32>
    %12 = vector.shape_cast %11 : vector<32xf32> to vector<32x1xf32>
    %cst_7 = arith.constant 0.000000e+00 : f32
    %13 = vector.broadcast %cst_7 : f32 to vector<32x1xf32>
    %14 = arith.maximumf %12, %13 : vector<32x1xf32>
    %15 = vector.broadcast %14 : vector<32x1xf32> to vector<32x128xf32>
    %16 = arith.subf %8, %15 : vector<32x128xf32>
    %17 = math.exp %16 : vector<32x128xf32>
    %cst_8 = arith.constant dense<0.000000e+00> : vector<32xf32>
    %18 = vector.multi_reduction <add>, %17, %cst_8 [1] : vector<32x128xf32> to vector<32xf32>
    %19 = vector.shape_cast %18 : vector<32xf32> to vector<32x1xf32>
    %cst_9 = arith.constant 0.000000e+00 : f32
    %20 = vector.broadcast %cst_9 : f32 to vector<32x1xf32>
    %21 = arith.subf %20, %14 : vector<32x1xf32>
    %22 = math.exp %21 : vector<32x1xf32>
    %23 = arith.addf %19, %22 : vector<32x1xf32>
    %24 = math.log %23 : vector<32x1xf32>
    %25 = arith.addf %14, %24 : vector<32x1xf32>
    %cst_10 = arith.constant dense<0xFF800000> : vector<32xf32>
    %26 = vector.multi_reduction <maximumf>, %10, %cst_10 [1] : vector<32x128xf32> to vector<32xf32>
    %27 = vector.shape_cast %26 : vector<32xf32> to vector<32x1xf32>
    %cst_11 = arith.constant 0.000000e+00 : f32
    %28 = vector.broadcast %cst_11 : f32 to vector<32x1xf32>
    %29 = arith.maximumf %27, %28 : vector<32x1xf32>
    %30 = vector.broadcast %29 : vector<32x1xf32> to vector<32x128xf32>
    %31 = arith.subf %10, %30 : vector<32x128xf32>
    %32 = math.exp %31 : vector<32x128xf32>
    %cst_12 = arith.constant dense<0.000000e+00> : vector<32xf32>
    %33 = vector.multi_reduction <add>, %32, %cst_12 [1] : vector<32x128xf32> to vector<32xf32>
    %34 = vector.shape_cast %33 : vector<32xf32> to vector<32x1xf32>
    %cst_13 = arith.constant 0.000000e+00 : f32
    %35 = vector.broadcast %cst_13 : f32 to vector<32x1xf32>
    %36 = arith.subf %35, %29 : vector<32x1xf32>
    %37 = math.exp %36 : vector<32x1xf32>
    %38 = arith.addf %34, %37 : vector<32x1xf32>
    %39 = math.log %38 : vector<32x1xf32>
    %40 = arith.addf %29, %39 : vector<32x1xf32>
    %41 = arith.addf %25, %40 : vector<32x1xf32>
    %c0_14 = arith.constant 0 : index
    %c0_15 = arith.constant 0 : index
    %42 = vector.load %arg3[%c0_14, %c0_15] : memref<32x1xf32, #tpu.memory_space<vmem>>, vector<32x1xf32>
    tpu.vector_store %arg3[%c0_14, %c0_15], %41 {strides = array<i32>} : memref<32x1xf32, #tpu.memory_space<vmem>>, vector<32x1xf32>,
    return
  }
  func.func @transform_0(%arg0: i32) -> (i32, i32) {
    %c0_i32 = arith.constant 0 : i32
    %c0_i32_0 = arith.constant 0 : i32
    return %arg0, %c0_i32 : i32, i32
  }
  func.func @transform_1(%arg0: i32) -> (i32, i32) {
    %c0_i32 = arith.constant 0 : i32
    %c0_i32_0 = arith.constant 0 : i32
    return %arg0, %c0_i32 : i32, i32
  }
  func.func @transform_2(%arg0: i32) -> (i32, i32) {
    %c0_i32 = arith.constant 0 : i32
    %c0_i32_0 = arith.constant 0 : i32
    return %arg0, %c0_i32 : i32, i32
  }
}

</mosaic_0001>

<llo_original>
// kernel: tpu_custom_call.1
$region0: #{tpu_custom_call.1}
  #allocation0 [shape = 'u32[]', space=smem, size = 0x4, offset = 0x4, fixed_abs, tag = 'smem constant byte address 0x4 - core index']
  #allocation1 [shape = 'u32[144,128]{1,0:T(1,128)}', space=vmem, size = 0x12000, scoped, tag = 'internal scratch']
  %s0 = inlined_call_operand.hbm [shape: f32[32,128], index: 0, kind: input, shape index: {}]
  %s1 = inlined_call_operand.hbm [shape: bf16[32,128], index: 1, kind: input, shape index: {}]
  %s2 = inlined_call_operand.vmem [shape: f32[32,1], index: 2, kind: output, shape index: {}]
  %s3 = sld [smem:[#allocation0]]
  $region26: #{tpu_custom_call.1} parent=0
    _
  %s5 = ssub.s32 1, %s3
  %s6 = scalar_select 0, %s5, %s3
  $region1: #{tpu_custom_call.1} parent=0
    #allocation2 [shape = 'u8[16384]{0}', space=vmem, size = 0x4000, scoped, tag = 'input window, operand 0, single buffered']
    #allocation3 [shape = 's32[1]{0}', space=sflag, size = 0x4, scoped, tag = 'scoped memory for tpu_custom_call.1']
    #allocation4 [shape = 'u8[8192]{0}', space=vmem, size = 0x2000, scoped, tag = 'input window, operand 1, single buffered']
    #allocation5 [shape = 's32[1]{0}', space=sflag, size = 0x4, scoped, tag = 'scoped memory for tpu_custom_call.1']
    %7 = vsyncpa [#allocation3], 0
    %8 = vsyncpa [#allocation5], 0
    // Predicated region
    $region2: #{tpu_custom_call.1} parent=1 // pred_check
      _
    $region3: #{tpu_custom_call.1} parent=1 // pred_check_branch
      %10 = sbr.rel (0) target = $region5
    $region4: #{tpu_custom_call.1} parent=1 // pred_region
      %s12 = ssub.s32 512, 512
      %13 = vsyncadd [#allocation3], %s12
      %s14 = sshll.u32 [#allocation2], 4
      %s15 = int_to_ptr.vmem [resolvable:$true] %s14
      %20 = dma.hbm_to_vmem [thread:$0]  %s0, 512, %s15, [#allocation3], 128, 128, 8
    $region5: #{tpu_custom_call.1} parent=1 // pred_fallthru
      _
    // Predicated region
    $region6: #{tpu_custom_call.1} parent=1 // pred_check
      _
    $region7: #{tpu_custom_call.1} parent=1 // pred_check_branch
      %22 = sbr.rel (0) target = $region9
    $region8: #{tpu_custom_call.1} parent=1 // pred_region
      %s24 = ssub.s32 256, 256
      %25 = vsyncadd [#allocation5], %s24
      %s26 = sshll.u32 [#allocation4], 4
      %s27 = int_to_ptr.vmem [resolvable:$true] %s26
      %32 = dma.hbm_to_vmem [thread:$0]  %s1, 256, %s27, [#allocation5], 64, 64, 4
    $region9: #{tpu_custom_call.1} parent=1 // pred_fallthru
      _
    // Predicated region
    $region10: #{tpu_custom_call.1} parent=1 // pred_check
      _
    $region11: #{tpu_custom_call.1} parent=1 // pred_check_branch
      %34 = sbr.rel (0) target = $region13
    $region12: #{tpu_custom_call.1} parent=1 // pred_region
      %35 = dma.done [#allocation3], 512
    $region13: #{tpu_custom_call.1} parent=1 // pred_fallthru
      _
    // Predicated region
    $region14: #{tpu_custom_call.1} parent=1 // pred_check
      _
    $region15: #{tpu_custom_call.1} parent=1 // pred_check_branch
      %37 = sbr.rel (0) target = $region17
    $region16: #{tpu_custom_call.1} parent=1 // pred_region
      %38 = dma.done [#allocation5], 256
    $region17: #{tpu_custom_call.1} parent=1 // pred_fallthru
      _
    %v42 = vld [vmem:[#allocation2] sm:$0xff]
    %v43 = vld [vmem:[#allocation2 + $0x8] sm:$0xff]
    %v44 = vld [vmem:[#allocation2 + $0x10] sm:$0xff]
    %v45 = vld [vmem:[#allocation2 + $0x18] sm:$0xff]
    %v46 = vld [vmem:[#allocation4] sm:$0xf]
    %v47 = vld [vmem:[#allocation4 + $0x4] sm:$0xf]
    %v48 = vld [vmem:[#allocation4 + $0x8] sm:$0xf]
    %v49 = vld [vmem:[#allocation4 + $0xc] sm:$0xf]
    %vm50 = vcmp.gt.bf16.partialorder %v46, 0
    %vm51 = vcmp.gt.bf16.partialorder %v47, 0
    %vm52 = vcmp.gt.bf16.partialorder %v48, 0
    %vm53 = vcmp.gt.bf16.partialorder %v49, 0
    %v54 = vsub.f32 0.0, %v42
    %v55 = vsub.f32 0.0, %v43
    %v56 = vsub.f32 0.0, %v44
    %v57 = vsub.f32 0.0, %v45
    %v58 = vsel %vm50, 65537, 0
    %v59 = vsel %vm51, 65537, 0
    %v60 = vsel %vm52, 65537, 0
    %v61 = vsel %vm53, 65537, 0
    %v62 = vunpack.c.l.b16 %v58
    %v63 = vunpack.c.l.b16 %v59
    %v64 = vunpack.c.l.b16 %v60
    %v65 = vunpack.c.l.b16 %v61
    %vm66 = vcmp.ne.s32.totalorder %v62, 0
    %vm67 = vcmp.ne.s32.totalorder %v63, 0
    %vm68 = vcmp.ne.s32.totalorder %v64, 0
    %vm69 = vcmp.ne.s32.totalorder %v65, 0
    %v70 = vsel %vm66, -1e+12, %v42
    %v71 = vsel %vm67, -1e+12, %v43
    %v72 = vsel %vm68, -1e+12, %v44
    %v73 = vsel %vm69, -1e+12, %v45
    %v74 = vsel %vm66, %v54, -1e+12
    %v75 = vsel %vm67, %v55, -1e+12
    %v76 = vsel %vm68, %v56, -1e+12
    %v77 = vsel %vm69, %v57, -1e+12
    %78 = vmax.xlane.f32.xlu0 %v70
    %v79 = vpop.xlane.xlu0 %78
    %80 = vmax.xlane.f32.xlu0 %v71
    %v81 = vpop.xlane.xlu0 %80
    %82 = vmax.xlane.f32.xlu0 %v72
    %v83 = vpop.xlane.xlu0 %82
    %84 = vmax.xlane.f32.xlu0 %v73
    %v85 = vpop.xlane.xlu0 %84
    %v86 = vmax.f32 %v79, 0.0
    %v87 = vmax.f32 %v81, 0.0
    %v88 = vmax.f32 %v83, 0.0
    %v89 = vmax.f32 %v85, 0.0
    %v90 = vsub.f32 %v70, %v86
    %v91 = vsub.f32 %v71, %v87
    %v92 = vsub.f32 %v72, %v88
    %v93 = vsub.f32 %v73, %v89
    %v94 = vmul.f32 %v90, 1.442695
    %v95 = vpow.pop %v94
    %v96 = vmul.f32 %v91, 1.442695
    %v97 = vpow.pop %v96
    %v98 = vmul.f32 %v92, 1.442695
    %v99 = vpow.pop %v98
    %v100 = vmul.f32 %v93, 1.442695
    %v101 = vpow.pop %v100
    %102 = vadd.xlane.f32.xlu0 %v95
    %v103 = vpop.xlane.xlu0 %102
    %104 = vadd.xlane.f32.xlu0 %v97
    %v105 = vpop.xlane.xlu0 %104
    %106 = vadd.xlane.f32.xlu0 %v99
    %v107 = vpop.xlane.xlu0 %106
    %108 = vadd.xlane.f32.xlu0 %v101
    %v109 = vpop.xlane.xlu0 %108
    %v110 = vsub.f32 0.0, %v86
    %v111 = vsub.f32 0.0, %v87
    %v112 = vsub.f32 0.0, %v88
    %v113 = vsub.f32 0.0, %v89
    %v114 = vmul.f32 %v110, 1.442695
    %v115 = vpow.pop %v114
    %v116 = vmul.f32 %v111, 1.442695
    %v117 = vpow.pop %v116
    %v118 = vmul.f32 %v112, 1.442695
    %v119 = vpow.pop %v118
    %v120 = vmul.f32 %v113, 1.442695
    %v121 = vpow.pop %v120
    %v122 = vadd.f32 %v103, %v115
    %v123 = vadd.f32 %v105, %v117
    %v124 = vadd.f32 %v107, %v119
    %v125 = vadd.f32 %v109, %v121
    %v126 = vlog2.pop %v122
    %v127 = vmul.f32 %v126, 0.6931472
    %v128 = vlog2.pop %v123
    %v129 = vmul.f32 %v128, 0.6931472
    %v130 = vlog2.pop %v124
    %v131 = vmul.f32 %v130, 0.6931472
    %v132 = vlog2.pop %v125
    %v133 = vmul.f32 %v132, 0.6931472
    %v134 = vadd.f32 %v86, %v127
    %v135 = vadd.f32 %v87, %v129
    %v136 = vadd.f32 %v88, %v131
    %v137 = vadd.f32 %v89, %v133
    %138 = vmax.xlane.f32.xlu0 %v74
    %v139 = vpop.xlane.xlu0 %138
    %140 = vmax.xlane.f32.xlu0 %v75
    %v141 = vpop.xlane.xlu0 %140
    %142 = vmax.xlane.f32.xlu0 %v76
    %v143 = vpop.xlane.xlu0 %142
    %144 = vmax.xlane.f32.xlu0 %v77
    %v145 = vpop.xlane.xlu0 %144
    %v146 = vmax.f32 %v139, 0.0
    %v147 = vmax.f32 %v141, 0.0
    %v148 = vmax.f32 %v143, 0.0
    %v149 = vmax.f32 %v145, 0.0
    %v150 = vsub.f32 %v74, %v146
    %v151 = vsub.f32 %v75, %v147
    %v152 = vsub.f32 %v76, %v148
    %v153 = vsub.f32 %v77, %v149
    %v154 = vmul.f32 %v150, 1.442695
    %v155 = vpow.pop %v154
    %v156 = vmul.f32 %v151, 1.442695
    %v157 = vpow.pop %v156
    %v158 = vmul.f32 %v152, 1.442695
    %v159 = vpow.pop %v158
    %v160 = vmul.f32 %v153, 1.442695
    %v161 = vpow.pop %v160
    %162 = vadd.xlane.f32.xlu0 %v155
    %v163 = vpop.xlane.xlu0 %162
    %164 = vadd.xlane.f32.xlu0 %v157
    %v165 = vpop.xlane.xlu0 %164
    %166 = vadd.xlane.f32.xlu0 %v159
    %v167 = vpop.xlane.xlu0 %166
    %168 = vadd.xlane.f32.xlu0 %v161
    %v169 = vpop.xlane.xlu0 %168
    %v170 = vsub.f32 0.0, %v146
    %v171 = vsub.f32 0.0, %v147
    %v172 = vsub.f32 0.0, %v148
    %v173 = vsub.f32 0.0, %v149
    %v174 = vmul.f32 %v170, 1.442695
    %v175 = vpow.pop %v174
    %v176 = vmul.f32 %v171, 1.442695
    %v177 = vpow.pop %v176
    %v178 = vmul.f32 %v172, 1.442695
    %v179 = vpow.pop %v178
    %v180 = vmul.f32 %v173, 1.442695
    %v181 = vpow.pop %v180
    %v182 = vadd.f32 %v163, %v175
    %v183 = vadd.f32 %v165, %v177
    %v184 = vadd.f32 %v167, %v179
    %v185 = vadd.f32 %v169, %v181
    %v186 = vlog2.pop %v182
    %v187 = vmul.f32 %v186, 0.6931472
    %v188 = vlog2.pop %v183
    %v189 = vmul.f32 %v188, 0.6931472
    %v190 = vlog2.pop %v184
    %v191 = vmul.f32 %v190, 0.6931472
    %v192 = vlog2.pop %v185
    %v193 = vmul.f32 %v192, 0.6931472
    %v194 = vadd.f32 %v146, %v187
    %v195 = vadd.f32 %v147, %v189
    %v196 = vadd.f32 %v148, %v191
    %v197 = vadd.f32 %v149, %v193
    %v198 = vadd.f32 %v134, %v194
    %v199 = vadd.f32 %v135, %v195
    %v200 = vadd.f32 %v136, %v196
    %v201 = vadd.f32 %v137, %v197
    %vm202 = vcmask 7168
    %203 = vst.msk [vmem:[%s2] sm:$0xff] %vm202, %v198
    %204 = vst.msk [vmem:[%s2 + $0x8] sm:$0xff] %vm202, %v199
    %205 = vst.msk [vmem:[%s2 + $0x10] sm:$0xff] %vm202, %v200
    %206 = vst.msk [vmem:[%s2 + $0x18] sm:$0xff] %vm202, %v201
    // Predicated region
    $region18: #{tpu_custom_call.1} parent=1 // pred_check
      _
    $region19: #{tpu_custom_call.1} parent=1 // pred_check_branch
      %208 = sbr.rel (0) target = $region21
    $region20: #{tpu_custom_call.1} parent=1 // pred_region
      _
    $region21: #{tpu_custom_call.1} parent=1 // pred_fallthru
      _
    // Predicated region
    $region22: #{tpu_custom_call.1} parent=1 // pred_check
      _
    $region23: #{tpu_custom_call.1} parent=1 // pred_check_branch
      %210 = sbr.rel (0) target = $region25
    $region24: #{tpu_custom_call.1} parent=1 // pred_region
      _
    $region25: #{tpu_custom_call.1} parent=1 // pred_fallthru
      _
    %211 = vsyncpa [#allocation3], 1
    %212 = vsyncpa [#allocation5], 1

</llo_original>
